<compile_context>
chip_gen: v6e
topology: v6e:2x2x1
jax: 0.10.0
libtpu: 0.0.40
codegen_flags: <defaults>
</compile_context>

<pallas_src>
import jax
import jax.numpy as jnp
from jax.experimental import pallas as pl
from jax.experimental.pallas import tpu as pltpu


def _identity_copy_kernel(in_ref, out_ref):
    # Contiguous full-row copy: pure vld/vst, no cross-lane work.
    out_ref[...] = in_ref[...]


def _pick_row_tile(n: int, out_c: int, dtype_bytes: int) -> int:
    """Pick a row-tile size: ~4 MiB per block, sublane-aligned (multiple of 8),
    or the full row count (exempt from the (8,128) divisibility rule)."""
    target_tile_bytes = 4 * 1024 * 1024
    row_bytes = max(out_c * dtype_bytes, 1)
    tile_n = target_tile_bytes // row_bytes
    tile_n = (tile_n // 8) * 8  # sublane alignment for f32 (stricter dtypes still ok: lane dim is full)
    if tile_n <= 0 or tile_n >= n:
        # Single full-array block (block dims == array dims -> always legal).
        tile_n = n
        # Keep >=2 grid steps when cheaply possible so v7x's 2 TCs both get work.
        if n >= 16 and (n // 2) % 8 == 0:
            tile_n = n // 2
    return tile_n


def siamese_concat_view(batch: jnp.ndarray, num_towers: int) -> jnp.ndarray:
    """Pallas implementation of vissl's SiameseConcatView.forward."""
    if batch.ndim == 4:
        # (N*num_towers, C, 1, 1) -> (N*num_towers, C); pure glue reshape.
        assert batch.shape[2] == 1 and batch.shape[3] == 1, (
            "4D input must have 1x1 spatial dims")
        batch = batch.reshape(batch.shape[0], batch.shape[1])
    assert batch.ndim == 2, "expected 2D (or 4D with 1x1 spatial) input"

    siamese_batch_size, c = batch.shape
    assert siamese_batch_size % num_towers == 0, (
        f"{siamese_batch_size} not divisible by num_towers {num_towers}")
    n = siamese_batch_size // num_towers
    out_c = num_towers * c

    # Free, metadata-only view on a contiguous row-major array.
    x = batch.reshape(n, out_c)

    dtype_bytes = jnp.dtype(x.dtype).itemsize
    tile_n = _pick_row_tile(n, out_c, dtype_bytes)
    grid = (pl.cdiv(n, tile_n),)

    bytes_accessed = 2 * n * out_c * dtype_bytes  # read + write

    return pl.pallas_call(
        _identity_copy_kernel,
        out_shape=jax.ShapeDtypeStruct((n, out_c), x.dtype),
        grid=grid,
        # Lane dim = full feature width (always legal); sublane dim multiple
        # of 8 or equal to N. Large tiles amortize grid-step overhead.
        in_specs=[pl.BlockSpec((tile_n, out_c), lambda i: (i, 0))],
        out_specs=pl.BlockSpec((tile_n, out_c), lambda i: (i, 0)),
        compiler_params=pltpu.CompilerParams(
            dimension_semantics=("parallel",),
            vmem_limit_bytes=32 * 1024 * 1024,
        ),
        cost_estimate=pl.CostEstimate(
            flops=0, transcendentals=0, bytes_accessed=bytes_accessed),
    )(x)


if __name__ == "__main__":
    key = jax.random.PRNGKey(0)

    # SiameseConcatView has no parameters (__init__ only stores num_towers).
    num_towers = 2
    n = 2          # batch_size after de-siamesing
    c = 32         # feature channels

    # 4D input (N*num_towers) x C x 1 x 1, as produced by a conv trunk.
    x = jax.random.normal(key, (n * num_towers, c, 1, 1), dtype=jnp.float32)

    out = siamese_concat_view(x, num_towers)
    out = jax.block_until_ready(out)

    # Reference: pure-JAX equivalent of batch.view(batch_size, -1)
    ref = x.reshape(n * num_towers, c).reshape(n, num_towers * c)

    assert out.shape == (n, num_towers * c), out.shape
    assert out.dtype == x.dtype
    assert jnp.allclose(out, ref), "mismatch vs reference reshape"

    # Also exercise a larger, tiled path (multiple grid steps, aligned tiles).
    n2, c2, t2 = 4096, 512, 2
    x2 = jax.random.normal(key, (n2 * t2, c2), dtype=jnp.float32)
    out2 = jax.block_until_ready(siamese_concat_view(x2, t2))
    ref2 = x2.reshape(n2, t2 * c2)
    assert out2.shape == (n2, t2 * c2)
    assert jnp.allclose(out2, ref2), "mismatch vs reference reshape (large case)"

    print("KERNEL_OK")
</pallas_src>

<mosaic_0001>
module attributes {stable_mosaic.version = 11 : i64} {
  func.func @_identity_copy_kernel(%arg0: i32, %arg1: memref<2x64xf32, #tpu.memory_space<vmem>>, %arg2: memref<2x64xf32, #tpu.memory_space<vmem>>) attributes {dimension_semantics = [#tpu.dimension_semantics<parallel>], iteration_bounds = array<i64: 1>, scalar_prefetch = 0 : i64, scratch_operands = 0 : i64, tpu.core_type = #tpu.core_type<tc>, window_params = [{transform_indices = @transform_0, window_bounds = array<i64: 2, 64>}, {transform_indices = @transform_1, window_bounds = array<i64: 2, 64>}]} {
    %c0 = arith.constant 0 : index
    %c0_0 = arith.constant 0 : index
    %0 = vector.load %arg1[%c0, %c0_0] : memref<2x64xf32, #tpu.memory_space<vmem>>, vector<2x64xf32>
    %c0_1 = arith.constant 0 : index
    %c0_2 = arith.constant 0 : index
    %1 = vector.load %arg2[%c0_1, %c0_2] : memref<2x64xf32, #tpu.memory_space<vmem>>, vector<2x64xf32>
    tpu.vector_store %arg2[%c0_1, %c0_2], %0 {strides = array<i32>} : memref<2x64xf32, #tpu.memory_space<vmem>>, vector<2x64xf32>,
    return
  }
  func.func @transform_0(%arg0: i32) -> (i32, i32) {
    %c0_i32 = arith.constant 0 : i32
    %c0_i32_0 = arith.constant 0 : i32
    return %arg0, %c0_i32 : i32, i32
  }
  func.func @transform_1(%arg0: i32) -> (i32, i32) {
    %c0_i32 = arith.constant 0 : i32
    %c0_i32_0 = arith.constant 0 : i32
    return %arg0, %c0_i32 : i32, i32
  }
}

</mosaic_0001>

<llo_original>
// kernel: tpu_custom_call.1
$region0: #{tpu_custom_call.1}
  #allocation0 [shape = 'u32[]', space=smem, size = 0x4, offset = 0x4, fixed_abs, tag = 'smem constant byte address 0x4 - core index']
  #allocation1 [shape = 'u32[144,128]{1,0:T(1,128)}', space=vmem, size = 0x12000, scoped, tag = 'internal scratch']
  %s0 = inlined_call_operand.hbm [shape: f32[2,64], index: 0, kind: input, shape index: {}]
  %s1 = inlined_call_operand.hbm [shape: f32[2,64], index: 1, kind: output, shape index: {}]
  %s2 = sld [smem:[#allocation0]]
  $region18: #{tpu_custom_call.1} parent=0
    _
  %s4 = ssub.s32 1, %s2
  %s5 = scalar_select 0, %s4, %s2
  $region1: #{tpu_custom_call.1} parent=0
    #allocation2 [shape = 'u8[1024]{0}', space=vmem, size = 0x400, scoped, tag = 'input window, operand 0, single buffered']
    #allocation3 [shape = 's32[1]{0}', space=sflag, size = 0x4, scoped, tag = 'scoped memory for tpu_custom_call.1']
    #allocation4 [shape = 's32[1]{0}', space=sflag, size = 0x4, scoped, tag = 'scoped memory for tpu_custom_call.1']
    #allocation5 [shape = 'u8[1024]{0}', space=vmem, size = 0x400, scoped, tag = 'output window, operand 0, single buffered']
    %6 = vsyncpa [#allocation3], 0
    %7 = vsyncpa [#allocation4], 0
    // Predicated region
    $region2: #{tpu_custom_call.1} parent=1 // pred_check
      _
    $region3: #{tpu_custom_call.1} parent=1 // pred_check_branch
      %9 = sbr.rel (0) target = $region5
    $region4: #{tpu_custom_call.1} parent=1 // pred_region
      %s11 = ssub.s32 32, 32
      %12 = vsyncadd [#allocation3], %s11
      %s14 = sshll.u32 [#allocation2], 4
      %s15 = int_to_ptr.vmem [resolvable:$true] %s14
      %17 = dma.hbm_to_vmem [thread:$0]  %s0, 32, %s15, [#allocation3]
    $region5: #{tpu_custom_call.1} parent=1 // pred_fallthru
      _
    // Predicated region
    $region6: #{tpu_custom_call.1} parent=1 // pred_check
      _
    $region7: #{tpu_custom_call.1} parent=1 // pred_check_branch
      %19 = sbr.rel (0) target = $region9
    $region8: #{tpu_custom_call.1} parent=1 // pred_region
      %20 = dma.done [#allocation3], 32
    $region9: #{tpu_custom_call.1} parent=1 // pred_fallthru
      _
    %v21 = vld [vmem:[#allocation2] sm:$0x3]
    %vm22 = vcmask 517120
    %23 = vst.msk [vmem:[#allocation5] sm:$0x3] %vm22, %v21
    // Predicated region
    $region10: #{tpu_custom_call.1} parent=1 // pred_check
      _
    $region11: #{tpu_custom_call.1} parent=1 // pred_check_branch
      %25 = sbr.rel (0) target = $region13
    $region12: #{tpu_custom_call.1} parent=1 // pred_region
      %s27 = ssub.s32 32, 32
      %28 = vsyncadd [#allocation4], %s27
      %s30 = sshll.u32 [#allocation5], 4
      %s31 = int_to_ptr.vmem [resolvable:$true] %s30
      %33 = dma.vmem_to_hbm [thread:$0]  %s31, 32, %s1, [#allocation4]
    $region13: #{tpu_custom_call.1} parent=1 // pred_fallthru
      _
    // Predicated region
    $region14: #{tpu_custom_call.1} parent=1 // pred_check
      _
    $region15: #{tpu_custom_call.1} parent=1 // pred_check_branch
      %35 = sbr.rel (0) target = $region17
    $region16: #{tpu_custom_call.1} parent=1 // pred_region
      %36 = dma.done [#allocation4], 32
    $region17: #{tpu_custom_call.1} parent=1 // pred_fallthru
      _
    %37 = vsyncpa [#allocation3], 1
    %38 = vsyncpa [#allocation4], 1

</llo_original>
